<compile_context>
chip_gen: v6e
topology: v6e:2x2x1
jax: 0.10.0
libtpu: 0.0.40
codegen_flags: <defaults>
</compile_context>

<pallas_src>
from dataclasses import dataclass, field
from typing import Any, Dict

import jax
import jax.numpy as jnp
from jax.experimental import pallas as pl
from jax.experimental.pallas import tpu as pltpu

# small problem sizes implied by an scvi-style VAE module
B, G, H, Z = 8, 128, 64, 32   # batch, genes, hidden, latent
LANE = 128                    # TPU lane width; packed outputs use this


# ----------------------------- fused Pallas kernel ----------------------------

def _fused_vae_kernel(x_ref, eps_ref, wenc_ref, wdec_ref, bias_ref,
                      latent_ref, px_ref, stats_ref):
    x = x_ref[...]                                     # (B, G)  f32
    eps = eps_ref[...]                                 # (B, Z)  f32

    # packed parameter slabs (static slices of the refs / loaded bias row)
    w1 = wenc_ref[0:G, :]                              # (G, H)   bf16
    w_head = wenc_ref[G:G + H, :]                      # (H, 2Z)  bf16  = [wm | wv]
    b1 = bias_ref[0:1, 0:H]                            # (1, H)   f32
    b_head = bias_ref[0:1, H:H + 2 * Z]                # (1, 2Z)  f32   = [bm | bv]
    bd = bias_ref[1:2, :]                              # (1, G)   f32

    # ---- encoder (inference): bf16 MXU operands, f32 accumulation ----
    h = jnp.dot(x.astype(jnp.bfloat16), w1,
                preferred_element_type=jnp.float32) + b1
    h = jnp.maximum(h, 0.0)                            # (B, H) f32

    head = jnp.dot(h.astype(jnp.bfloat16), w_head,
                   preferred_element_type=jnp.float32) + b_head   # (B, 2Z)
    qz_m = head[:, :Z]                                 # (B, Z)
    qz_logv = jnp.clip(head[:, Z:], -15.0, 15.0)       # variance safeguard
    sigma = jnp.exp(0.5 * qz_logv)                     # single EUP transcendental
    qz_v = sigma * sigma                               # VPU mul (no extra exp/sqrt)

    # reparameterized sample z = mu + sigma * eps (eps supplied by the wrapper)
    z = qz_m + sigma * eps                             # (B, Z)

    # ---- decoder (generative) ----
    px = jnp.dot(z.astype(jnp.bfloat16), wdec_ref[...],
                 preferred_element_type=jnp.float32) + bd          # (B, G)

    # ---- loss terms: per-obs MSE reconstruction + Gaussian KL (from logv) ----
    recon = jnp.sum((x - px) ** 2, axis=-1, keepdims=True)          # (B, 1)
    kl = 0.5 * jnp.sum(qz_m * qz_m + qz_v - qz_logv - 1.0,
                       axis=-1, keepdims=True)                      # (B, 1)

    # ---- packed outputs ----
    # latent slab: [ qz_m | qz_v | z | pad ]  -> lane-slice stores, no concatenate
    latent_ref[...] = jnp.zeros((B, LANE), jnp.float32)
    latent_ref[:, 0:Z] = qz_m
    latent_ref[:, Z:2 * Z] = qz_v
    latent_ref[:, 2 * Z:3 * Z] = z

    px_ref[...] = px

    # stats slab: lane0 = recon/obs, lane1 = kl/obs (mean loss computed outside)
    stats_ref[...] = jnp.zeros((B, LANE), jnp.float32)
    stats_ref[:, 0:1] = recon
    stats_ref[:, 1:2] = kl


def _vmem():
    return pl.BlockSpec(memory_space=pltpu.MemorySpace.VMEM)


_fused_pallas = pl.pallas_call(
    _fused_vae_kernel,
    out_shape=(
        jax.ShapeDtypeStruct((B, LANE), jnp.float32),   # latent slab [qz_m|qz_v|z|pad]
        jax.ShapeDtypeStruct((B, G), jnp.float32),      # px
        jax.ShapeDtypeStruct((B, LANE), jnp.float32),   # stats slab [recon|kl|0...]
    ),
    in_specs=[_vmem()] * 5,
    out_specs=(_vmem(), _vmem(), _vmem()),
)


@jax.jit
def _fused_forward(rng_key, x, w_enc, w_dec, b_all):
    """One jitted executable: eps draw + fused pallas_call + output unpacking."""
    eps = jax.random.normal(rng_key, (B, Z), jnp.float32)
    latent, px, stats = _fused_pallas(x, eps, w_enc, w_dec, b_all)
    qz_m = latent[:, :Z]
    qz_v = latent[:, Z:2 * Z]
    z = latent[:, 2 * Z:3 * Z]
    recon = stats[:, 0]                       # (B,)
    kl = stats[:, 1]                          # (B,)
    loss = jnp.mean(recon + kl)               # scalar mean over minibatch
    return qz_m, qz_v, z, px, recon, kl, loss


# ----------------------------- scvi base plumbing -----------------------------

def _get_dict_if_none(param):
    return {} if not isinstance(param, dict) else param


def _generic_forward(module, tensors, inference_kwargs, generative_kwargs,
                     loss_kwargs, get_inference_input_kwargs,
                     get_generative_input_kwargs, compute_loss):
    inference_kwargs = _get_dict_if_none(inference_kwargs)
    generative_kwargs = _get_dict_if_none(generative_kwargs)
    loss_kwargs = _get_dict_if_none(loss_kwargs)
    get_inference_input_kwargs = _get_dict_if_none(get_inference_input_kwargs)
    get_generative_input_kwargs = _get_dict_if_none(get_generative_input_kwargs)
    inference_inputs = module._get_inference_input(tensors, **get_inference_input_kwargs)
    inference_outputs = module.inference(**inference_inputs, **inference_kwargs)
    generative_inputs = module._get_generative_input(
        tensors, inference_outputs, **get_generative_input_kwargs)
    generative_outputs = module.generative(**generative_inputs, **generative_kwargs)
    if compute_loss:
        losses = module.loss(tensors, inference_outputs, generative_outputs, **loss_kwargs)
        return inference_outputs, generative_outputs, losses
    return inference_outputs, generative_outputs


@dataclass
class LossOutput:
    loss: Any
    reconstruction_loss: Any = None
    kl_local: Any = None
    kl_global: Any = None
    classification_loss: Any = None
    logits: Any = None
    true_labels: Any = None
    extra_metrics: Dict[str, Any] = field(default_factory=dict)
    n_obs_minibatch: int = None
    reconstruction_loss_sum: Any = field(default=None)
    kl_local_sum: Any = field(default=None)
    kl_global_sum: Any = field(default=None)

    def __post_init__(self):
        self.loss = self.dict_sum(self.loss)
        if self.n_obs_minibatch is None and self.reconstruction_loss is None:
            raise ValueError("Must provide either n_obs_minibatch or reconstruction_loss")
        default = 0 * self.loss
        if self.reconstruction_loss is None:
            self.reconstruction_loss = default
        if self.kl_local is None:
            self.kl_local = default
        if self.kl_global is None:
            self.kl_global = default
        self.reconstruction_loss = self._as_dict("reconstruction_loss")
        self.kl_local = self._as_dict("kl_local")
        self.kl_global = self._as_dict("kl_global")
        self.reconstruction_loss_sum = self.dict_sum(self.reconstruction_loss).sum()
        self.kl_local_sum = self.dict_sum(self.kl_local).sum()
        self.kl_global_sum = self.dict_sum(self.kl_global)
        if self.reconstruction_loss is not None and self.n_obs_minibatch is None:
            rec_loss = self.reconstruction_loss
            self.n_obs_minibatch = list(rec_loss.values())[0].shape[0]

    @staticmethod
    def dict_sum(dictionary):
        if isinstance(dictionary, dict):
            return sum(dictionary.values())
        return dictionary

    def _as_dict(self, attr_name):
        attr = getattr(self, attr_name)
        if isinstance(attr, dict):
            return attr
        return {attr_name: attr}


# ----------------------------- concrete module --------------------------------

class ToyVAEModule:
    """Concrete instantiation of BaseModuleClass with a single fused Pallas kernel.

    Encoder/decoder/loss are computed in one fused, jitted pallas_call during
    `inference()`; `generative()` and `loss()` consume the fused results (computed
    from the exact same z / x), so the forward-pass semantics of
    inference -> generative -> loss -> LossOutput are unchanged.
    """

    def __init__(self, key, rng_key=None):
        k1, k2, k3, k4 = jax.random.split(key, 4)
        s = 0.05
        w1 = s * jax.random.normal(k1, (G, H), jnp.float32)
        wm = s * jax.random.normal(k2, (H, Z), jnp.float32)
        wv = s * jax.random.normal(k3, (H, Z), jnp.float32)
        wd = s * jax.random.normal(k4, (Z, G), jnp.float32)
        b1 = jnp.zeros((1, H), jnp.float32)
        bm = jnp.zeros((1, Z), jnp.float32)
        bv = jnp.zeros((1, Z), jnp.float32)
        bd = jnp.zeros((1, G), jnp.float32)

        # --- packed parameter slabs (few large DMAs instead of 10 small ones) ---
        w_head = jnp.concatenate([wm, wv], axis=1)                       # (H, 2Z)
        self.w_enc = jnp.concatenate([w1, w_head], axis=0).astype(jnp.bfloat16)  # (G+H, H)
        self.w_dec = wd.astype(jnp.bfloat16)                             # (Z, G)
        self.b_all = jnp.concatenate(
            [jnp.concatenate([b1, bm, bv], axis=1), bd], axis=0)         # (2, 128) f32

        self._rng_key = rng_key if rng_key is not None else jax.random.PRNGKey(42)
        # TODO(synk): _fused_cache side-channel between inference/generative/loss
        # is not jit/vmap-safe plumbing; fine for the eager forward() flow here.
        self._fused_cache = None

    # --- BaseModuleClass abstract-method implementations ---
    def _get_inference_input(self, tensors, **kwargs):
        return {"x": tensors["X"]}

    def inference(self, x, rng_key=None, **kwargs):
        if rng_key is None:
            # fresh noise every forward pass (stateful key split)
            self._rng_key, rng_key = jax.random.split(self._rng_key)
        qz_m, qz_v, z, px, recon, kl, loss = _fused_forward(
            rng_key, x, self.w_enc, self.w_dec, self.b_all)
        # fused kernel also produced the generative/loss results; stash them so
        # generative()/loss() reuse them instead of re-launching kernels.
        self._fused_cache = {"px": px, "recon": recon, "kl": kl, "loss": loss}
        return {"qz_m": qz_m, "qz_v": qz_v, "z": z}

    def _get_generative_input(self, tensors, inference_outputs, **kwargs):
        return {"z": inference_outputs["z"]}

    def generative(self, z, **kwargs):
        # px was produced by the fused kernel from this same z (kept in VMEM).
        return {"px": self._fused_cache["px"]}

    def loss(self, tensors, inference_outputs, generative_outputs, **kwargs):
        c = self._fused_cache
        return LossOutput(
            loss=c["loss"],
            reconstruction_loss=c["recon"],
            kl_local=c["kl"],
        )

    def forward(self, tensors, get_inference_input_kwargs=None,
                get_generative_input_kwargs=None, inference_kwargs=None,
                generative_kwargs=None, loss_kwargs=None, compute_loss=True):
        return _generic_forward(self, tensors, inference_kwargs, generative_kwargs,
                                loss_kwargs, get_inference_input_kwargs,
                                get_generative_input_kwargs, compute_loss)

    # TODO(synk): BaseModuleClass.sample() (posterior-predictive sampling) is not
    # exercised by forward() and is left unimplemented.


# ----------------------------- main --------------------------------

if __name__ == "__main__":
    key = jax.random.PRNGKey(0)
    k_data, k_params, k_noise = jax.random.split(key, 3)
    x = jax.random.normal(k_data, (B, G), jnp.float32)

    module = ToyVAEModule(k_params, rng_key=k_noise)
    inference_outputs, generative_outputs, losses = module.forward({"X": x})

    jax.block_until_ready(inference_outputs["z"])
    jax.block_until_ready(generative_outputs["px"])
    jax.block_until_ready(losses.loss)
    jax.block_until_ready(losses.reconstruction_loss_sum)
    jax.block_until_ready(losses.kl_local_sum)

    assert losses.loss.shape == ()
    assert bool(jnp.isfinite(losses.loss))
    assert losses.n_obs_minibatch == B
    assert inference_outputs["qz_m"].shape == (B, Z)
    assert inference_outputs["qz_v"].shape == (B, Z)
    assert inference_outputs["z"].shape == (B, Z)
    assert generative_outputs["px"].shape == (B, G)
    print("KERNEL_OK")
</pallas_src>

<mosaic_0001>
module attributes {stable_mosaic.version = 11 : i64} {
  func.func @_fused_vae_kernel(%arg0: memref<8x128xf32, #tpu.memory_space<vmem>>, %arg1: memref<8x32xf32, #tpu.memory_space<vmem>>, %arg2: memref<192x64xbf16, #tpu.memory_space<vmem>>, %arg3: memref<32x128xbf16, #tpu.memory_space<vmem>>, %arg4: memref<2x128xf32, #tpu.memory_space<vmem>>, %arg5: memref<8x128xf32, #tpu.memory_space<vmem>>, %arg6: memref<8x128xf32, #tpu.memory_space<vmem>>, %arg7: memref<8x128xf32, #tpu.memory_space<vmem>>) attributes {dimension_semantics = [], scalar_prefetch = 0 : i64, scratch_operands = 0 : i64, tpu.core_type = #tpu.core_type<tc>} {
    %c0 = arith.constant 0 : index
    %c0_0 = arith.constant 0 : index
    %0 = vector.load %arg0[%c0, %c0_0] : memref<8x128xf32, #tpu.memory_space<vmem>>, vector<8x128xf32>
    %c0_1 = arith.constant 0 : index
    %c0_2 = arith.constant 0 : index
    %1 = vector.load %arg1[%c0_1, %c0_2] : memref<8x32xf32, #tpu.memory_space<vmem>>, vector<8x32xf32>
    %c0_3 = arith.constant 0 : index
    %c0_4 = arith.constant 0 : index
    %2 = vector.load %arg2[%c0_3, %c0_4] : memref<192x64xbf16, #tpu.memory_space<vmem>>, vector<128x64xbf16>
    %c128 = arith.constant 128 : index
    %c0_5 = arith.constant 0 : index
    %3 = vector.load %arg2[%c128, %c0_5] : memref<192x64xbf16, #tpu.memory_space<vmem>>, vector<64x64xbf16>
    %c0_6 = arith.constant 0 : index
    %c0_7 = arith.constant 0 : index
    %4 = vector.load %arg4[%c0_6, %c0_7] : memref<2x128xf32, #tpu.memory_space<vmem>>, vector<1x64xf32>
    %c0_8 = arith.constant 0 : index
    %c64 = arith.constant 64 : index
    %5 = vector.load %arg4[%c0_8, %c64] : memref<2x128xf32, #tpu.memory_space<vmem>>, vector<1x64xf32>
    %c1 = arith.constant 1 : index
    %c0_9 = arith.constant 0 : index
    %6 = vector.load %arg4[%c1, %c0_9] : memref<2x128xf32, #tpu.memory_space<vmem>>, vector<1x128xf32>
    %7 = arith.truncf %0 : vector<8x128xf32> to vector<8x128xbf16>
    %cst = arith.constant dense<0.000000e+00> : vector<8x64xf32>
    %8 = tpu.matmul %7, %2, %cst {dimension_numbers = #tpu.dot_dimension_numbers<[1], [0], [0], [1], [0, 0, 1, 1], [], []>} : vector<8x128xbf16>, vector<128x64xbf16>, vector<8x64xf32> -> vector<8x64xf32>
    %9 = vector.broadcast %4 : vector<1x64xf32> to vector<8x64xf32>
    %10 = arith.addf %8, %9 : vector<8x64xf32>
    %cst_10 = arith.constant 0.000000e+00 : f32
    %11 = vector.broadcast %cst_10 : f32 to vector<8x64xf32>
    %12 = arith.maximumf %10, %11 : vector<8x64xf32>
    %13 = arith.truncf %12 : vector<8x64xf32> to vector<8x64xbf16>
    %cst_11 = arith.constant dense<0.000000e+00> : vector<8x64xf32>
    %14 = tpu.matmul %13, %3, %cst_11 {dimension_numbers = #tpu.dot_dimension_numbers<[1], [0], [0], [1], [0, 0, 1, 1], [], []>} : vector<8x64xbf16>, vector<64x64xbf16>, vector<8x64xf32> -> vector<8x64xf32>
    %15 = vector.broadcast %5 : vector<1x64xf32> to vector<8x64xf32>
    %16 = arith.addf %14, %15 : vector<8x64xf32>
    %17 = vector.extract_strided_slice %16 {offsets = [0, 0], sizes = [8, 32], strides = [1, 1]} : vector<8x64xf32> to vector<8x32xf32>
    %18 = vector.extract_strided_slice %16 {offsets = [0, 32], sizes = [8, 32], strides = [1, 1]} : vector<8x64xf32> to vector<8x32xf32>
    %cst_12 = arith.constant -1.500000e+01 : f32
    %cst_13 = arith.constant 1.500000e+01 : f32
    %19 = vector.broadcast %cst_12 : f32 to vector<8x32xf32>
    %20 = arith.maximumf %19, %18 : vector<8x32xf32>
    %21 = vector.broadcast %cst_13 : f32 to vector<8x32xf32>
    %22 = arith.minimumf %21, %20 : vector<8x32xf32>
    %cst_14 = arith.constant 5.000000e-01 : f32
    %23 = vector.broadcast %cst_14 : f32 to vector<8x32xf32>
    %24 = arith.mulf %23, %22 : vector<8x32xf32>
    %25 = math.exp %24 : vector<8x32xf32>
    %26 = arith.mulf %25, %25 : vector<8x32xf32>
    %27 = arith.mulf %25, %1 : vector<8x32xf32>
    %28 = arith.addf %17, %27 : vector<8x32xf32>
    %29 = arith.truncf %28 : vector<8x32xf32> to vector<8x32xbf16>
    %c0_15 = arith.constant 0 : index
    %c0_16 = arith.constant 0 : index
    %30 = vector.load %arg3[%c0_15, %c0_16] : memref<32x128xbf16, #tpu.memory_space<vmem>>, vector<32x128xbf16>
    %cst_17 = arith.constant dense<0.000000e+00> : vector<8x128xf32>
    %31 = tpu.matmul %29, %30, %cst_17 {dimension_numbers = #tpu.dot_dimension_numbers<[1], [0], [0], [1], [0, 0, 1, 1], [], []>} : vector<8x32xbf16>, vector<32x128xbf16>, vector<8x128xf32> -> vector<8x128xf32>
    %32 = vector.broadcast %6 : vector<1x128xf32> to vector<8x128xf32>
    %33 = arith.addf %31, %32 : vector<8x128xf32>
    %34 = arith.subf %0, %33 : vector<8x128xf32>
    %35 = arith.mulf %34, %34 : vector<8x128xf32>
    %cst_18 = arith.constant dense<0.000000e+00> : vector<8xf32>
    %36 = vector.multi_reduction <add>, %35, %cst_18 [1] : vector<8x128xf32> to vector<8xf32>
    %37 = vector.shape_cast %36 : vector<8xf32> to vector<8x1xf32>
    %38 = arith.mulf %17, %17 : vector<8x32xf32>
    %39 = arith.addf %38, %26 : vector<8x32xf32>
    %40 = arith.subf %39, %22 : vector<8x32xf32>
    %cst_19 = arith.constant 1.000000e+00 : f32
    %41 = vector.broadcast %cst_19 : f32 to vector<8x32xf32>
    %42 = arith.subf %40, %41 : vector<8x32xf32>
    %cst_20 = arith.constant dense<0.000000e+00> : vector<8xf32>
    %43 = vector.multi_reduction <add>, %42, %cst_20 [1] : vector<8x32xf32> to vector<8xf32>
    %44 = vector.shape_cast %43 : vector<8xf32> to vector<8x1xf32>
    %cst_21 = arith.constant 5.000000e-01 : f32
    %45 = vector.broadcast %cst_21 : f32 to vector<8x1xf32>
    %46 = arith.mulf %45, %44 : vector<8x1xf32>
    %cst_22 = arith.constant 0.000000e+00 : f32
    %47 = vector.broadcast %cst_22 : f32 to vector<8x128xf32>
    %c0_23 = arith.constant 0 : index
    %c0_24 = arith.constant 0 : index
    %48 = vector.load %arg5[%c0_23, %c0_24] : memref<8x128xf32, #tpu.memory_space<vmem>>, vector<8x128xf32>
    tpu.vector_store %arg5[%c0_23, %c0_24], %47 {strides = array<i32>} : memref<8x128xf32, #tpu.memory_space<vmem>>, vector<8x128xf32>,
    %c0_25 = arith.constant 0 : index
    %c0_26 = arith.constant 0 : index
    %49 = vector.load %arg5[%c0_25, %c0_26] : memref<8x128xf32, #tpu.memory_space<vmem>>, vector<8x32xf32>
    tpu.vector_store %arg5[%c0_25, %c0_26], %17 {strides = array<i32>} : memref<8x128xf32, #tpu.memory_space<vmem>>, vector<8x32xf32>,
    %c0_27 = arith.constant 0 : index
    %c32 = arith.constant 32 : index
    %50 = vector.load %arg5[%c0_27, %c32] : memref<8x128xf32, #tpu.memory_space<vmem>>, vector<8x32xf32>
    tpu.vector_store %arg5[%c0_27, %c32], %26 {strides = array<i32>} : memref<8x128xf32, #tpu.memory_space<vmem>>, vector<8x32xf32>,
    %c0_28 = arith.constant 0 : index
    %c64_29 = arith.constant 64 : index
    %51 = vector.load %arg5[%c0_28, %c64_29] : memref<8x128xf32, #tpu.memory_space<vmem>>, vector<8x32xf32>
    tpu.vector_store %arg5[%c0_28, %c64_29], %28 {strides = array<i32>} : memref<8x128xf32, #tpu.memory_space<vmem>>, vector<8x32xf32>,
    %c0_30 = arith.constant 0 : index
    %c0_31 = arith.constant 0 : index
    %52 = vector.load %arg6[%c0_30, %c0_31] : memref<8x128xf32, #tpu.memory_space<vmem>>, vector<8x128xf32>
    tpu.vector_store %arg6[%c0_30, %c0_31], %33 {strides = array<i32>} : memref<8x128xf32, #tpu.memory_space<vmem>>, vector<8x128xf32>,
    %cst_32 = arith.constant 0.000000e+00 : f32
    %53 = vector.broadcast %cst_32 : f32 to vector<8x128xf32>
    %c0_33 = arith.constant 0 : index
    %c0_34 = arith.constant 0 : index
    %54 = vector.load %arg7[%c0_33, %c0_34] : memref<8x128xf32, #tpu.memory_space<vmem>>, vector<8x128xf32>
    tpu.vector_store %arg7[%c0_33, %c0_34], %53 {strides = array<i32>} : memref<8x128xf32, #tpu.memory_space<vmem>>, vector<8x128xf32>,
    %c0_35 = arith.constant 0 : index
    %c0_36 = arith.constant 0 : index
    %55 = vector.load %arg7[%c0_35, %c0_36] : memref<8x128xf32, #tpu.memory_space<vmem>>, vector<8x1xf32>
    tpu.vector_store %arg7[%c0_35, %c0_36], %37 {strides = array<i32>} : memref<8x128xf32, #tpu.memory_space<vmem>>, vector<8x1xf32>,
    %c0_37 = arith.constant 0 : index
    %c1_38 = arith.constant 1 : index
    %56 = vector.load %arg7[%c0_37, %c1_38] : memref<8x128xf32, #tpu.memory_space<vmem>>, vector<8x1xf32>
    tpu.vector_store %arg7[%c0_37, %c1_38], %46 {strides = array<i32>} : memref<8x128xf32, #tpu.memory_space<vmem>>, vector<8x1xf32>,
    return
  }
}

</mosaic_0001>

<llo_original>
// kernel: _fused_forward.1
$region0: #{_fused_forward.1}
  #allocation0 [shape = 'u32[]', space=smem, size = 0x4, offset = 0x4, fixed_abs, tag = 'smem constant byte address 0x4 - core index']
  #allocation1 [shape = 'u32[144,128]{1,0:T(1,128)}', space=vmem, size = 0x12000, scoped, tag = 'internal scratch']
  %s0 = inlined_call_operand.vmem [shape: f32[8,128], index: 0, kind: input, shape index: {}]
  %s1 = inlined_call_operand.vmem [shape: f32[8,32], index: 1, kind: input, shape index: {}]
  %s2 = inlined_call_operand.vmem [shape: bf16[192,64], index: 2, kind: input, shape index: {}]
  %s3 = inlined_call_operand.vmem [shape: bf16[32,128], index: 3, kind: input, shape index: {}]
  %s4 = inlined_call_operand.vmem [shape: f32[2,128], index: 4, kind: input, shape index: {}]
  %s5 = inlined_call_operand.vmem [shape: f32[8,128], index: 5, kind: output, shape index: {0}]
  %s6 = inlined_call_operand.hbm [shape: f32[8,128], index: 6, kind: output, shape index: {1}]
  %s7 = inlined_call_operand.vmem [shape: f32[8,128], index: 7, kind: output, shape index: {2}]
  %8 = xla_tuple %s5, %s6, %s7
  %s9 = sld [smem:[#allocation0]]
  $region46: #{_fused_forward.1} parent=0
    _
  %s11 = ssub.s32 1, %s9
  %s12 = scalar_select 0, %s11, %s9
  $region1: #{_fused_forward.1} parent=0
    #allocation2 [shape = 'u8[4096]{0}', space=vmem, size = 0x1000, scoped, tag = 'output window, operand 1, single buffered']
    #allocation3 [shape = 's32[1]{0}', space=sflag, size = 0x4, scoped, tag = 'scoped memory for _fused_forward.1']
    %13 = vsyncpa [#allocation3], 0
    // Predicated region
    $region2: #{_fused_forward.1} parent=1 // pred_check
      _
    $region3: #{_fused_forward.1} parent=1 // pred_check_branch
      %15 = sbr.rel (0) target = $region5
    $region4: #{_fused_forward.1} parent=1 // pred_region
      _
    $region5: #{_fused_forward.1} parent=1 // pred_fallthru
      _
    // Predicated region
    $region6: #{_fused_forward.1} parent=1 // pred_check
      _
    $region7: #{_fused_forward.1} parent=1 // pred_check_branch
      %17 = sbr.rel (0) target = $region9
    $region8: #{_fused_forward.1} parent=1 // pred_region
      _
    $region9: #{_fused_forward.1} parent=1 // pred_fallthru
      _
    // Predicated region
    $region10: #{_fused_forward.1} parent=1 // pred_check
      _
    $region11: #{_fused_forward.1} parent=1 // pred_check_branch
      %19 = sbr.rel (0) target = $region13
    $region12: #{_fused_forward.1} parent=1 // pred_region
      _
    $region13: #{_fused_forward.1} parent=1 // pred_fallthru
      _
    // Predicated region
    $region14: #{_fused_forward.1} parent=1 // pred_check
      _
    $region15: #{_fused_forward.1} parent=1 // pred_check_branch
      %21 = sbr.rel (0) target = $region17
    $region16: #{_fused_forward.1} parent=1 // pred_region
      _
    $region17: #{_fused_forward.1} parent=1 // pred_fallthru
      _
    // Predicated region
    $region18: #{_fused_forward.1} parent=1 // pred_check
      _
    $region19: #{_fused_forward.1} parent=1 // pred_check_branch
      %23 = sbr.rel (0) target = $region21
    $region20: #{_fused_forward.1} parent=1 // pred_region
      _
    $region21: #{_fused_forward.1} parent=1 // pred_fallthru
      _
    %v25 = vld [vmem:[%s0] sm:$0xff]
    %v26 = vld [vmem:[%s1] sm:$0xff]
    %v27 = vld [vmem:[%s2] sm:$0xf]
    %v28 = vld [vmem:[%s2 + $0x4] sm:$0xf]
    %v29 = vld [vmem:[%s2 + $0x8] sm:$0xf]
    %v30 = vld [vmem:[%s2 + $0xc] sm:$0xf]
    %v31 = vld [vmem:[%s2 + $0x10] sm:$0xf]
    %v32 = vld [vmem:[%s2 + $0x14] sm:$0xf]
    %v33 = vld [vmem:[%s2 + $0x18] sm:$0xf]
    %v34 = vld [vmem:[%s2 + $0x1c] sm:$0xf]
    %v35 = vld [vmem:[%s2 + $0x20] sm:$0xf]
    %v36 = vld [vmem:[%s2 + $0x24] sm:$0xf]
    %v37 = vld [vmem:[%s2 + $0x28] sm:$0xf]
    %v38 = vld [vmem:[%s2 + $0x2c] sm:$0xf]
    %v39 = vld [vmem:[%s2 + $0x30] sm:$0xf]
    %v40 = vld [vmem:[%s2 + $0x34] sm:$0xf]
    %v41 = vld [vmem:[%s2 + $0x38] sm:$0xf]
    %v42 = vld [vmem:[%s2 + $0x3c] sm:$0xf]
    %v43 = vld [vmem:[%s2 + $0x40] sm:$0xf]
    %v44 = vld [vmem:[%s2 + $0x44] sm:$0xf]
    %v45 = vld [vmem:[%s2 + $0x48] sm:$0xf]
    %v46 = vld [vmem:[%s2 + $0x4c] sm:$0xf]
    %v47 = vld [vmem:[%s2 + $0x50] sm:$0xf]
    %v48 = vld [vmem:[%s2 + $0x54] sm:$0xf]
    %v49 = vld [vmem:[%s2 + $0x58] sm:$0xf]
    %v50 = vld [vmem:[%s2 + $0x5c] sm:$0xf]
    %v51 = vld [vmem:[%s4] sm:$0x1]
    %v52 = vld [vmem:[%s4 + $0x1] sm:$0x1]
    %v53 = vpack.c.bf16 %v25, %v25
    %v54 = vlaneseq
    %v55 = vshrl.u32 %v54, 7
    %v56 = vsub.s32 0, %v55
    %v57 = vrot.slane %v51, %v56
    %v74 = vunpack.c.l.b16 %v27
    %v75 = vunpack.c.l.b16 %v28
    %v76 = vunpack.c.l.b16 %v29
    %v77 = vunpack.c.l.b16 %v30
    %v78 = vunpack.c.l.b16 %v31
    %v79 = vunpack.c.l.b16 %v32
    %v80 = vunpack.c.l.b16 %v33
    %v81 = vunpack.c.l.b16 %v34
    %v82 = vunpack.c.l.b16 %v35
    %v83 = vunpack.c.l.b16 %v36
    %v84 = vunpack.c.l.b16 %v37
    %v85 = vunpack.c.l.b16 %v38
    %v86 = vunpack.c.l.b16 %v39
    %v87 = vunpack.c.l.b16 %v40
    %v88 = vunpack.c.l.b16 %v41
    %v89 = vunpack.c.l.b16 %v42
    %v90 = vpack.c.b16 %v75, %v74
    %v91 = vpack.c.b16 %v77, %v76
    %v92 = vpack.c.b16 %v79, %v78
    %v93 = vpack.c.b16 %v81, %v80
    %v94 = vpack.c.b16 %v83, %v82
    %v95 = vpack.c.b16 %v85, %v84
    %v96 = vpack.c.b16 %v87, %v86
    %v97 = vpack.c.b16 %v89, %v88
    %106 = vmatprep.subr.bf16.mxu0 0
    %107 = vmatpush1.bf16.msra.mxu0 %v97
    %108 = vmatprep.subr.bf16.mxu0 0
    %109 = vmatpush1.bf16.msra.mxu0 %v96
    %110 = vmatprep.subr.bf16.mxu0 0
    %111 = vmatpush1.bf16.msra.mxu0 %v95
    %112 = vmatprep.subr.bf16.mxu0 0
    %113 = vmatpush1.bf16.msra.mxu0 %v94
    %114 = vmatprep.subr.bf16.mxu0 0
    %115 = vmatpush1.bf16.msra.mxu0 %v93
    %116 = vmatprep.subr.bf16.mxu0 0
    %117 = vmatpush1.bf16.msra.mxu0 %v92
    %118 = vmatprep.subr.bf16.mxu0 0
    %119 = vmatpush1.bf16.msra.mxu0 %v91
    %120 = vmatprep.subr.bf16.mxu0 0
    %121 = vmatpush1.bf16.msra.mxu0 %v90
    %122 = vmatprep.subr.bf16.mxu0 0
    %123 = vmatpush2.bf16.msra.mxu0 0
    %124 = vmatprep.subr.bf16.mxu0 0
    %125 = vmatpush2.bf16.msra.mxu0 0
    %126 = vmatprep.subr.bf16.mxu0 0
    %127 = vmatpush2.bf16.msra.mxu0 0
    %128 = vmatprep.subr.bf16.mxu0 0
    %129 = vmatpush2.bf16.msra.mxu0 0
    %130 = vmatprep.subr.bf16.mxu0 0
    %131 = vmatpush2.bf16.msra.mxu0 0
    %132 = vmatprep.subr.bf16.mxu0 0
    %133 = vmatpush2.bf16.msra.mxu0 0
    %134 = vmatprep.subr.bf16.mxu0 0
    %135 = vmatpush2.bf16.msra.mxu0 0
    %136 = vmatprep.subr.bf16.mxu0 0
    %137 = vmatpush2.bf16.msra.mxu0 0
    %138 = vmatprep.mubr.bf16.mxu0 0
    %139 = vmatmul.mubr.bf16.gmra.mxu0 %v53
    %v140 = vpop.f32.mrf.mxu0
    %v141 = vadd.f32 %v57, %v140
    %v142 = vpop.f32.mrf.mxu0
    %v143 = vpop.f32.mrf.mxu0
    %v144 = vpop.f32.mrf.mxu0
    %145 = vdwg.mxu0
    %v146 = vmax.f32 %v141, 0.0
    %v147 = vpack.c.bf16 %v146, %v146
    %v156 = vunpack.c.l.b16 %v43
    %v157 = vunpack.c.l.b16 %v44
    %v158 = vunpack.c.l.b16 %v45
    %v159 = vunpack.c.l.b16 %v46
    %v160 = vunpack.c.l.b16 %v47
    %v161 = vunpack.c.l.b16 %v48
    %v162 = vunpack.c.l.b16 %v49
    %v163 = vunpack.c.l.b16 %v50
    %v164 = vpack.c.b16 %v157, %v156
    %v165 = vpack.c.b16 %v159, %v158
    %v166 = vpack.c.b16 %v161, %v160
    %v167 = vpack.c.b16 %v163, %v162
    %173 = vrot.lane.b32.xlu0 %v57, 64
    %v174 = vpop.permute.xlu0 %173
    %vm176 = vcmask 523264
    %v178 = vsel %vm176, %v147, 0
    %180 = vmatprep.subr.bf16.mxu0 0
    %181 = vmatpush1.bf16.msra.mxu0 0
    %182 = vmatprep.subr.bf16.mxu0 0
    %183 = vmatpush1.bf16.msra.mxu0 0
    %184 = vmatprep.subr.bf16.mxu0 0
    %185 = vmatpush1.bf16.msra.mxu0 0
    %186 = vmatprep.subr.bf16.mxu0 0
    %187 = vmatpush1.bf16.msra.mxu0 0
    %188 = vmatprep.subr.bf16.mxu0 0
    %189 = vmatpush1.bf16.msra.mxu0 %v167
    %190 = vmatprep.subr.bf16.mxu0 0
    %191 = vmatpush1.bf16.msra.mxu0 %v166
    %192 = vmatprep.subr.bf16.mxu0 0
    %193 = vmatpush1.bf16.msra.mxu0 %v165
    %194 = vmatprep.subr.bf16.mxu0 0
    %195 = vmatpush1.bf16.msra.mxu0 %v164
    %196 = vmatprep.subr.bf16.mxu0 0
    %197 = vmatpush2.bf16.msra.mxu0 0
    %198 = vmatprep.subr.bf16.mxu0 0
    %199 = vmatpush2.bf16.msra.mxu0 0
    %200 = vmatprep.subr.bf16.mxu0 0
    %201 = vmatpush2.bf16.msra.mxu0 0
    %202 = vmatprep.subr.bf16.mxu0 0
    %203 = vmatpush2.bf16.msra.mxu0 0
    %204 = vmatprep.subr.bf16.mxu0 0
    %205 = vmatpush2.bf16.msra.mxu0 0
    %206 = vmatprep.subr.bf16.mxu0 0
    %207 = vmatpush2.bf16.msra.mxu0 0
    %208 = vmatprep.subr.bf16.mxu0 0
    %209 = vmatpush2.bf16.msra.mxu0 0
    %210 = vmatprep.subr.bf16.mxu0 0
    %211 = vmatpush2.bf16.msra.mxu0 0
    %212 = vmatprep.mubr.bf16.mxu0 0
    %213 = vmatmul.mubr.bf16.gmra.mxu0 %v178
    %v214 = vpop.f32.mrf.mxu0
    %v215 = vadd.f32 %v174, %v214
    %v216 = vpop.f32.mrf.mxu0
    %v217 = vpop.f32.mrf.mxu0
    %v218 = vpop.f32.mrf.mxu0
    %219 = vdwg.mxu0
    %v220 = vmax.f32 %v215, -15.0
    %v221 = vmin.f32 %v220, 15.0
    %v222 = vmul.f32 %v221, 0.5
    %v223 = vmul.f32 %v222, 1.442695
    %v224 = vpow.pop %v223
    %v225 = vmul.f32 %v224, %v224
    %227 = vrot.lane.b32.xlu0 %v26, 32
    %v228 = vpop.permute.xlu0 %227
    %v230 = vmul.f32 %v224, %v228
    %232 = vrot.lane.b32.xlu0 %v230, 96
    %v233 = vpop.permute.xlu0 %232
    %v235 = vadd.f32 %v215, %v233
    %v236 = vpack.c.bf16 %v235, %v235
    %v237 = vld [vmem:[%s3] sm:$0xf]
    %v238 = vld [vmem:[%s3 + $0x4] sm:$0xf]
    %v239 = vld [vmem:[%s3 + $0x8] sm:$0xf]
    %v240 = vld [vmem:[%s3 + $0xc] sm:$0xf]
    %v241 = vlaneseq
    %v242 = vshrl.u32 %v241, 7
    %v243 = vsub.s32 0, %v242
    %v244 = vrot.slane %v52, %v243
    %v249 = vunpack.c.l.b16 %v237
    %v250 = vunpack.c.l.b16 %v238
    %v251 = vunpack.c.l.b16 %v239
    %v252 = vunpack.c.l.b16 %v240
    %v253 = vpack.c.b16 %v250, %v249
    %v254 = vpack.c.b16 %v252, %v251
    %vm257 = vcmask 261120
    %v259 = vsel %vm257, %v236, 0
    %261 = vmatprep.subr.bf16.mxu0 0
    %262 = vmatpush1.bf16.msra.mxu0 0
    %263 = vmatprep.subr.bf16.mxu0 0
    %264 = vmatpush1.bf16.msra.mxu0 0
    %265 = vmatprep.subr.bf16.mxu0 0
    %266 = vmatpush1.bf16.msra.mxu0 0
    %267 = vmatprep.subr.bf16.mxu0 0
    %268 = vmatpush1.bf16.msra.mxu0 0
    %269 = vmatprep.subr.bf16.mxu0 0
    %270 = vmatpush1.bf16.msra.mxu0 0
    %271 = vmatprep.subr.bf16.mxu0 0
    %272 = vmatpush1.bf16.msra.mxu0 0
    %273 = vmatprep.subr.bf16.mxu0 0
    %274 = vmatpush1.bf16.msra.mxu0 %v254
    %275 = vmatprep.subr.bf16.mxu0 0
    %276 = vmatpush1.bf16.msra.mxu0 %v253
    %277 = vmatprep.subr.bf16.mxu0 0
    %278 = vmatpush2.bf16.msra.mxu0 0
    %279 = vmatprep.subr.bf16.mxu0 0
    %280 = vmatpush2.bf16.msra.mxu0 0
    %281 = vmatprep.subr.bf16.mxu0 0
    %282 = vmatpush2.bf16.msra.mxu0 0
    %283 = vmatprep.subr.bf16.mxu0 0
    %284 = vmatpush2.bf16.msra.mxu0 0
    %285 = vmatprep.subr.bf16.mxu0 0
    %286 = vmatpush2.bf16.msra.mxu0 0
    %287 = vmatprep.subr.bf16.mxu0 0
    %288 = vmatpush2.bf16.msra.mxu0 0
    %289 = vmatprep.subr.bf16.mxu0 0
    %290 = vmatpush2.bf16.msra.mxu0 0
    %291 = vmatprep.subr.bf16.mxu0 0
    %292 = vmatpush2.bf16.msra.mxu0 0
    %293 = vmatprep.mubr.bf16.mxu0 0
    %294 = vmatmul.mubr.bf16.gmra.mxu0 %v259
    %v295 = vpop.f32.mrf.mxu0
    %v296 = vadd.f32 %v244, %v295
    %v297 = vpop.f32.mrf.mxu0
    %v298 = vpop.f32.mrf.mxu0
    %v299 = vpop.f32.mrf.mxu0
    %300 = vdwg.mxu0
    %v301 = vsub.f32 %v25, %v296
    %v302 = vmul.f32 %v301, %v301
    %303 = vadd.xlane.f32.xlu0 %v302
    %v304 = vpop.xlane.xlu0 %303
    %v305 = vmul.f32 %v215, %v215
    %307 = vrot.lane.b32.xlu0 %v225, 96
    %v308 = vpop.permute.xlu0 %307
    %v310 = vadd.f32 %v305, %v308
    %312 = vrot.lane.b32.xlu0 %v221, 96
    %v313 = vpop.permute.xlu0 %312
    %v315 = vsub.f32 %v310, %v313
    %v316 = vsub.f32 %v315, 1.0
    %v317 = vsel %vm257, %v316, 0.0
    %318 = vadd.xlane.f32.xlu0 %v317
    %v319 = vpop.xlane.xlu0 %318
    %v320 = vmul.f32 %v319, 0.5
    %321 = vst [vmem:[%s5] sm:$0xff] 0.0
    %322 = vst.msk [vmem:[%s5] sm:$0xff] %vm257, %v215
    %vm323 = vcmask 523520
    %324 = vst.msk [vmem:[%s5] sm:$0xff] %vm323, %v225
    %326 = vrot.lane.b32.xlu0 %v235, 64
    %v327 = vpop.permute.xlu0 %326
    %vm329 = vcmask 785920
    %330 = vst.msk [vmem:[%s5] sm:$0xff] %vm329, %v327
    %331 = vst [vmem:[#allocation2] sm:$0xff] %v296
    %332 = vst [vmem:[%s7] sm:$0xff] 0.0
    %vm333 = vcmask 7168
    %334 = vst.msk [vmem:[%s7] sm:$0xff] %vm333, %v304
    %vm335 = vcmask 15368
    %336 = vst.msk [vmem:[%s7] sm:$0xff] %vm335, %v320
    // Predicated region
    $region22: #{_fused_forward.1} parent=1 // pred_check
      _
    $region23: #{_fused_forward.1} parent=1 // pred_check_branch
      %338 = sbr.rel (0) target = $region25
    $region24: #{_fused_forward.1} parent=1 // pred_region
      _
    $region25: #{_fused_forward.1} parent=1 // pred_fallthru
      _
    // Predicated region
    $region26: #{_fused_forward.1} parent=1 // pred_check
      _
    $region27: #{_fused_forward.1} parent=1 // pred_check_branch
      %340 = sbr.rel (0) target = $region29
    $region28: #{_fused_forward.1} parent=1 // pred_region
      %s342 = ssub.s32 128, 128
      %343 = vsyncadd [#allocation3], %s342
      %s345 = sshll.u32 [#allocation2], 4
      %s346 = int_to_ptr.vmem [resolvable:$true] %s345
      %348 = dma.vmem_to_hbm [thread:$0]  %s346, 128, %s6, [#allocation3]
    $region29: #{_fused_forward.1} parent=1 // pred_fallthru
      _
    // Predicated region
    $region30: #{_fused_forward.1} parent=1 // pred_check
      _
    $region31: #{_fused_forward.1} parent=1 // pred_check_branch
      %350 = sbr.rel (0) target = $region33
    $region32: #{_fused_forward.1} parent=1 // pred_region
      _
    $region33: #{_fused_forward.1} parent=1 // pred_fallthru
      _
    // Predicated region
    $region34: #{_fused_forward.1} parent=1 // pred_check
      _
    $region35: #{_fused_forward.1} parent=1 // pred_check_branch
      %352 = sbr.rel (0) target = $region37
    $region36: #{_fused_forward.1} parent=1 // pred_region
      _
    $region37: #{_fused_forward.1} parent=1 // pred_fallthru
      _
    // Predicated region
    $region38: #{_fused_forward.1} parent=1 // pred_check
      _
    $region39: #{_fused_forward.1} parent=1 // pred_check_branch
      %354 = sbr.rel (0) target = $region41
    $region40: #{_fused_forward.1} parent=1 // pred_region
      %355 = dma.done [#allocation3], 128
    $region41: #{_fused_forward.1} parent=1 // pred_fallthru
      _
    // Predicated region
    $region42: #{_fused_forward.1} parent=1 // pred_check
      _
    $region43: #{_fused_forward.1} parent=1 // pred_check_branch
      %357 = sbr.rel (0) target = $region45
    $region44: #{_fused_forward.1} parent=1 // pred_region
      _
    $region45: #{_fused_forward.1} parent=1 // pred_fallthru
      _
    %358 = vsyncpa [#allocation3], 1

</llo_original>
